<compile_context>
chip_gen: v6e
topology: v6e:2x2x1
jax: 0.10.0
libtpu: 0.0.40
codegen_flags: <defaults>
</compile_context>

<pallas_src>
import functools

import jax
import jax.numpy as jnp
from jax.experimental import pallas as pl
from jax.experimental.pallas import tpu as pltpu


def _la_loss_kernel(logits_ref, adj_ref, tgt_ref, out_ref, acc_ref,
                    *, n_rows, inv_n, needs_mask):
    # logits_ref: (TM, C) native dtype ; adj_ref: (1, C) f32 ;
    # tgt_ref: (TM, 1) i32 ; out_ref: (1, 1) f32 ; acc_ref: VMEM (1, 1) f32
    i = pl.program_id(0)

    @pl.when(i == 0)
    def _():
        acc_ref[...] = jnp.zeros_like(acc_ref)

    # Upcast inside the kernel (keeps HBM traffic at native dtype width) and
    # apply the LA bias (broadcast over rows).
    x = logits_ref[...].astype(jnp.float32) + adj_ref[...]        # (TM, C) f32
    tgt = tgt_ref[...]                                            # (TM, 1) i32

    # Target gather without an f32 one-hot: compare + select + lane reduce.
    class_ids = jax.lax.broadcasted_iota(jnp.int32, x.shape, 1)
    tgt_logit = jnp.sum(jnp.where(class_ids == tgt, x, 0.0),
                        axis=-1, keepdims=True)                   # (TM, 1)

    # Numerically stable cross entropy: lse(x) - x[target]
    m = jnp.max(x, axis=-1, keepdims=True)                        # (TM, 1)
    lse = m + jnp.log(jnp.sum(jnp.exp(x - m), axis=-1, keepdims=True))
    per_example = lse - tgt_logit                                 # (TM, 1)

    if needs_mask:
        # Mask rows past the true batch size (padded last tile only).
        tm = x.shape[0]
        row_ids = jax.lax.broadcasted_iota(jnp.int32, (tm, 1), 0) + i * tm
        per_example = jnp.where(row_ids < n_rows, per_example, 0.0)

    acc_ref[...] += jnp.sum(per_example, keepdims=True)           # (1, 1)

    @pl.when(i == pl.num_programs(0) - 1)
    def _():
        out_ref[...] = acc_ref[...] * inv_n                       # mean reduction


def make_la_loss(class_frequency, tau: float = 1.0, eps: float = 1e-12,
                 block_rows: int | None = None):
    """Builds the LA-loss callable. Mirrors LALoss.__init__ buffer math in JAX."""
    freq = jnp.asarray(class_frequency, dtype=jnp.float32)
    label_probability = freq / jnp.sum(freq)
    adjustments = (tau * jnp.log(label_probability + eps)).reshape(1, -1).astype(jnp.float32)

    @jax.jit
    def la_loss(logits: jax.Array, targets: jax.Array) -> jax.Array:
        n, c = logits.shape
        tgt2d = targets.astype(jnp.int32).reshape(n, 1)
        itemsize = jnp.dtype(logits.dtype).itemsize

        if block_rows is not None:
            tm = block_rows
        else:
            # Keep one double-buffered logits tile comfortably inside the
            # scoped-VMEM default on every generation (v5e/v6e/v7x).
            budget = 8 * 1024 * 1024                 # bytes per logits buffer
            tm = max(8, min(1024, budget // max(1, c * itemsize)))
            tm = max(8, (tm // 8) * 8)
        if n <= tm:
            tm = n                                    # full-extent block is always legal
        num_tiles = pl.cdiv(n, tm)
        needs_mask = (n % tm) != 0                    # static: only pad-masking when needed

        kernel = functools.partial(
            _la_loss_kernel, n_rows=n, inv_n=float(1.0 / n), needs_mask=needs_mask)

        out = pl.pallas_call(
            kernel,
            out_shape=jax.ShapeDtypeStruct((1, 1), jnp.float32),
            grid=(num_tiles,),
            in_specs=[
                pl.BlockSpec((tm, c), lambda i: (i, 0)),     # logits: batch-tiled
                pl.BlockSpec((1, c), lambda i: (0, 0)),      # adjustments: resident
                pl.BlockSpec((tm, 1), lambda i: (i, 0)),     # targets: batch-tiled
            ],
            out_specs=pl.BlockSpec((1, 1), lambda i: (0, 0)),
            scratch_shapes=[pltpu.VMEM((1, 1), jnp.float32)],
            compiler_params=pltpu.CompilerParams(
                # accumulation across batch tiles -> reduction axis is "arbitrary"
                dimension_semantics=("arbitrary",),
            ),
            cost_estimate=pl.CostEstimate(
                flops=5 * n * c,
                transcendentals=n * c + n,
                bytes_accessed=n * c * itemsize + n * 4 + c * 4 + 4,
            ),
        )(logits, adjustments, tgt2d)
        return out[0, 0]

    return la_loss, adjustments


def _reference_la_loss(logits, targets, adjustments):
    x = logits.astype(jnp.float32) + adjustments
    lse = jax.scipy.special.logsumexp(x, axis=-1)
    tgt = x[jnp.arange(x.shape[0]), targets]
    return jnp.mean(lse - tgt)


if __name__ == "__main__":
    key = jax.random.PRNGKey(0)
    k1, k2, k3, k4 = jax.random.split(key, 4)

    num_classes = 4
    class_frequency = [100, 40, 10, 2]

    # --- Test 1: small batch, f32, single tile ---------------------------------
    batch = 8
    logits = jax.random.normal(k1, (batch, num_classes), dtype=jnp.float32)
    targets = jax.random.randint(k2, (batch,), 0, num_classes, dtype=jnp.int32)

    la_loss, adjustments = make_la_loss(class_frequency, tau=1.0, eps=1e-12)
    loss = la_loss(logits, targets)
    jax.block_until_ready(loss)
    ref = _reference_la_loss(logits, targets, adjustments)
    assert jnp.allclose(loss, ref, atol=1e-5, rtol=1e-5), (loss, ref)

    # --- Test 2: forced batch tiling with a partial last tile (f32) ------------
    batch2 = 20
    logits2 = jax.random.normal(k3, (batch2, num_classes), dtype=jnp.float32)
    targets2 = jax.random.randint(k4, (batch2,), 0, num_classes, dtype=jnp.int32)

    la_loss_tiled, _ = make_la_loss(class_frequency, tau=1.0, eps=1e-12, block_rows=8)
    loss2 = la_loss_tiled(logits2, targets2)
    jax.block_until_ready(loss2)
    ref2 = _reference_la_loss(logits2, targets2, adjustments)
    assert jnp.allclose(loss2, ref2, atol=1e-5, rtol=1e-5), (loss2, ref2)

    # --- Test 3: exact multiple of the tile (mask branch statically elided) ----
    loss2b = la_loss_tiled(logits2[:16], targets2[:16])
    jax.block_until_ready(loss2b)
    ref2b = _reference_la_loss(logits2[:16], targets2[:16], adjustments)
    assert jnp.allclose(loss2b, ref2b, atol=1e-5, rtol=1e-5), (loss2b, ref2b)

    # --- Test 4: bf16 logits stay bf16 across the DMA, upcast inside kernel ----
    logits_bf16 = logits2.astype(jnp.bfloat16)
    loss3 = la_loss_tiled(logits_bf16, targets2)
    jax.block_until_ready(loss3)
    ref3 = _reference_la_loss(logits_bf16, targets2, adjustments)
    assert jnp.allclose(loss3, ref3, atol=1e-5, rtol=1e-5), (loss3, ref3)

    print("KERNEL_OK")
</pallas_src>

<mosaic_0001>
module attributes {stable_mosaic.version = 11 : i64} {
  func.func @_la_loss_kernel(%arg0: i32, %arg1: memref<8x4xf32, #tpu.memory_space<vmem>>, %arg2: memref<1x4xf32, #tpu.memory_space<vmem>>, %arg3: memref<8x1xi32, #tpu.memory_space<vmem>>, %arg4: memref<1x1xf32, #tpu.memory_space<vmem>>, %arg5: memref<1x1xf32, #tpu.memory_space<vmem>>) attributes {dimension_semantics = [#tpu.dimension_semantics<arbitrary>], iteration_bounds = array<i64: 1>, scalar_prefetch = 0 : i64, scratch_operands = 1 : i64, tpu.core_type = #tpu.core_type<tc>, window_params = [{transform_indices = @transform_0, window_bounds = array<i64: 8, 4>}, {pipeline_mode = #tpu.pipeline_mode<synchronous>, transform_indices = @transform_1, window_bounds = array<i64: 1, 4>}, {transform_indices = @transform_2, window_bounds = array<i64: 8, 1>}, {pipeline_mode = #tpu.pipeline_mode<synchronous>, transform_indices = @transform_3, window_bounds = array<i64: 1, 1>}]} {
    %c0_i32 = arith.constant 0 : i32
    %0 = arith.cmpi eq, %arg0, %c0_i32 : i32
    %1 = arith.extui %0 : i1 to i32
    %c0_i32_0 = arith.constant 0 : i32
    %2 = arith.cmpi ne, %1, %c0_i32_0 : i32
    scf.if %2 {
      %cst_16 = arith.constant 0.000000e+00 : f32
      %36 = vector.broadcast %cst_16 : f32 to vector<1x1xf32>
      %c0_17 = arith.constant 0 : index
      %c0_18 = arith.constant 0 : index
      %37 = vector.load %arg5[%c0_17, %c0_18] : memref<1x1xf32, #tpu.memory_space<vmem>>, vector<1x1xf32>
      tpu.vector_store %arg5[%c0_17, %c0_18], %36 {strides = array<i32>} : memref<1x1xf32, #tpu.memory_space<vmem>>, vector<1x1xf32>,
    } else {
    }
    %c0 = arith.constant 0 : index
    %c0_1 = arith.constant 0 : index
    %3 = vector.load %arg1[%c0, %c0_1] : memref<8x4xf32, #tpu.memory_space<vmem>>, vector<8x4xf32>
    %c0_2 = arith.constant 0 : index
    %c0_3 = arith.constant 0 : index
    %4 = vector.load %arg2[%c0_2, %c0_3] : memref<1x4xf32, #tpu.memory_space<vmem>>, vector<1x4xf32>
    %5 = vector.broadcast %4 : vector<1x4xf32> to vector<8x4xf32>
    %6 = arith.addf %3, %5 : vector<8x4xf32>
    %c0_4 = arith.constant 0 : index
    %c0_5 = arith.constant 0 : index
    %7 = vector.load %arg3[%c0_4, %c0_5] : memref<8x1xi32, #tpu.memory_space<vmem>>, vector<8x1xi32>
    %8 = tpu.iota {dimensions = array<i32: 1>} : vector<8x4xi32>
    %9 = vector.broadcast %7 : vector<8x1xi32> to vector<8x4xi32>
    %10 = arith.cmpi eq, %8, %9 : vector<8x4xi32>
    %cst = arith.constant 0.000000e+00 : f32
    %11 = vector.broadcast %cst : f32 to vector<8x4xf32>
    %12 = arith.select %10, %6, %11 : vector<8x4xi1>, vector<8x4xf32>
    %cst_6 = arith.constant dense<0.000000e+00> : vector<8xf32>
    %13 = vector.multi_reduction <add>, %12, %cst_6 [1] : vector<8x4xf32> to vector<8xf32>
    %14 = vector.shape_cast %13 : vector<8xf32> to vector<8x1xf32>
    %cst_7 = arith.constant dense<0xFF800000> : vector<8xf32>
    %15 = vector.multi_reduction <maximumf>, %6, %cst_7 [1] : vector<8x4xf32> to vector<8xf32>
    %16 = vector.shape_cast %15 : vector<8xf32> to vector<8x1xf32>
    %17 = vector.broadcast %16 : vector<8x1xf32> to vector<8x4xf32>
    %18 = arith.subf %6, %17 : vector<8x4xf32>
    %19 = math.exp %18 : vector<8x4xf32>
    %cst_8 = arith.constant dense<0.000000e+00> : vector<8xf32>
    %20 = vector.multi_reduction <add>, %19, %cst_8 [1] : vector<8x4xf32> to vector<8xf32>
    %21 = vector.shape_cast %20 : vector<8xf32> to vector<8x1xf32>
    %22 = math.log %21 : vector<8x1xf32>
    %23 = arith.addf %16, %22 : vector<8x1xf32>
    %24 = arith.subf %23, %14 : vector<8x1xf32>
    %c0_9 = arith.constant 0 : index
    %c0_10 = arith.constant 0 : index
    %25 = vector.load %arg5[%c0_9, %c0_10] : memref<1x1xf32, #tpu.memory_space<vmem>>, vector<1x1xf32>
    %26 = vector.shape_cast %24 : vector<8x1xf32> to vector<1x8x1xf32>
    %cst_11 = arith.constant dense<0.000000e+00> : vector<1xf32>
    %27 = vector.multi_reduction <add>, %26, %cst_11 [1, 2] : vector<1x8x1xf32> to vector<1xf32>
    %28 = vector.shape_cast %27 : vector<1xf32> to vector<1x1x1xf32>
    %29 = vector.extract %28[0, 0, 0] : f32 from vector<1x1x1xf32>
    %30 = vector.broadcast %29 : f32 to vector<1x1xf32>
    %31 = arith.addf %25, %30 : vector<1x1xf32>
    %c0_12 = arith.constant 0 : index
    %c0_13 = arith.constant 0 : index
    %32 = vector.load %arg5[%c0_12, %c0_13] : memref<1x1xf32, #tpu.memory_space<vmem>>, vector<1x1xf32>
    tpu.vector_store %arg5[%c0_12, %c0_13], %31 {strides = array<i32>} : memref<1x1xf32, #tpu.memory_space<vmem>>, vector<1x1xf32>,
    %c0_i32_14 = arith.constant 0 : i32
    %33 = arith.cmpi eq, %arg0, %c0_i32_14 : i32
    %34 = arith.extui %33 : i1 to i32
    %c0_i32_15 = arith.constant 0 : i32
    %35 = arith.cmpi ne, %34, %c0_i32_15 : i32
    scf.if %35 {
      %c0_16 = arith.constant 0 : index
      %c0_17 = arith.constant 0 : index
      %36 = vector.load %arg5[%c0_16, %c0_17] : memref<1x1xf32, #tpu.memory_space<vmem>>, vector<1x1xf32>
      %cst_18 = arith.constant 1.250000e-01 : f32
      %37 = vector.broadcast %cst_18 : f32 to vector<1x1xf32>
      %38 = arith.mulf %36, %37 : vector<1x1xf32>
      %c0_19 = arith.constant 0 : index
      %c0_20 = arith.constant 0 : index
      %39 = vector.load %arg4[%c0_19, %c0_20] : memref<1x1xf32, #tpu.memory_space<vmem>>, vector<1x1xf32>
      tpu.vector_store %arg4[%c0_19, %c0_20], %38 {strides = array<i32>} : memref<1x1xf32, #tpu.memory_space<vmem>>, vector<1x1xf32>,
    } else {
    }
    return
  }
  func.func @transform_0(%arg0: i32) -> (i32, i32) {
    %c0_i32 = arith.constant 0 : i32
    %c0_i32_0 = arith.constant 0 : i32
    return %arg0, %c0_i32 : i32, i32
  }
  func.func @transform_1(%arg0: i32) -> (i32, i32) {
    %c0_i32 = arith.constant 0 : i32
    %c0_i32_0 = arith.constant 0 : i32
    %c0_i32_1 = arith.constant 0 : i32
    return %c0_i32, %c0_i32_0 : i32, i32
  }
  func.func @transform_2(%arg0: i32) -> (i32, i32) {
    %c0_i32 = arith.constant 0 : i32
    %c0_i32_0 = arith.constant 0 : i32
    return %arg0, %c0_i32 : i32, i32
  }
  func.func @transform_3(%arg0: i32) -> (i32, i32) {
    %c0_i32 = arith.constant 0 : i32
    %c0_i32_0 = arith.constant 0 : i32
    %c0_i32_1 = arith.constant 0 : i32
    return %c0_i32, %c0_i32_0 : i32, i32
  }
}

</mosaic_0001>

<llo_original>
// kernel: la_loss.1
$region0: #{la_loss.1}
  #allocation0 [shape = 'u32[]', space=smem, size = 0x4, offset = 0x4, fixed_abs, tag = 'smem constant byte address 0x4 - core index']
  #allocation1 [shape = 'u32[144,128]{1,0:T(1,128)}', space=vmem, size = 0x12000, scoped, tag = 'internal scratch']
  #allocation2 [shape = 'f32[1,1]{1,0:T(1,128)}', space=vmem, size = 0x200, scoped, tag = 'scratch operand']
  %s0 = inlined_call_operand.vmem [shape: f32[8,4], index: 0, kind: input, shape index: {}]
  %s1 = inlined_call_operand.vmem [shape: f32[1,4], index: 1, kind: input, shape index: {}]
  %s2 = inlined_call_operand.vmem [shape: s32[8,1], index: 2, kind: input, shape index: {}]
  %s3 = inlined_call_operand.hbm [shape: f32[1,1], index: 3, kind: output, shape index: {}]
  %s4 = sld [smem:[#allocation0]]
  $region30: #{la_loss.1} parent=0
    _
  %s6 = ssub.s32 1, %s4
  %s7 = scalar_select 0, %s6, %s4
  $region1: #{la_loss.1} parent=0
    #allocation3 [shape = 'u8[512]{0}', space=vmem, size = 0x400, scoped, tag = 'output window, operand 0, single buffered']
    #allocation4 [shape = 's32[1]{0}', space=sflag, size = 0x4, scoped, tag = 'scoped memory for la_loss.1']
    %8 = vsyncpa [#allocation4], 0
    // Predicated region
    $region2: #{la_loss.1} parent=1 // pred_check
      _
    $region3: #{la_loss.1} parent=1 // pred_check_branch
      %10 = sbr.rel (0) target = $region5
    $region4: #{la_loss.1} parent=1 // pred_region
      _
    $region5: #{la_loss.1} parent=1 // pred_fallthru
      _
    // Predicated region
    $region6: #{la_loss.1} parent=1 // pred_check
      _
    $region7: #{la_loss.1} parent=1 // pred_check_branch
      %12 = sbr.rel (0) target = $region9
    $region8: #{la_loss.1} parent=1 // pred_region
      _
    $region9: #{la_loss.1} parent=1 // pred_fallthru
      _
    // Predicated region
    $region10: #{la_loss.1} parent=1 // pred_check
      _
    $region11: #{la_loss.1} parent=1 // pred_check_branch
      %14 = sbr.rel (0) target = $region13
    $region12: #{la_loss.1} parent=1 // pred_region
      _
    $region13: #{la_loss.1} parent=1 // pred_fallthru
      _
    %p15 = scmp.eq.s32.totalorder 0, 0
    // Predicated region
    $region14: #{la_loss.1} parent=1 // pred_check
      %p16 = pneg %p15
    $region15: #{la_loss.1} parent=1 // pred_check_branch
      %18 = sbr.rel (%p16) target = $region17
    $region16: #{la_loss.1} parent=1 // pred_region
      %vm19 = vcmask 0
      %20 = vst.msk [vmem:[#allocation2] sm:$0x1] %vm19, 0.0
    $region17: #{la_loss.1} parent=1 // pred_fallthru
      _
    %v21 = vld [vmem:[%s0] sm:$0xff]
    %v22 = vld [vmem:[%s1] sm:$0x1]
    %v24 = vlaneseq
    %v25 = vshrl.u32 %v24, 7
    %v26 = vsub.s32 0, %v25
    %v27 = vrot.slane %v22, %v26
    %v29 = vadd.f32 %v21, %v27
    %v30 = vld [vmem:[%s2] sm:$0xff]
    %v31 = vlaneseq
    %v32 = vand.u32 %v31, 127
    %33 = vset.pattern.permute.xlu0 0
    %34 = vperm.xlu0 %33, %v30
    %v35 = vpop.permute.xlu0 %34
    %vm36 = vcmp.eq.s32.totalorder %v32, %v35
    %v37 = vsel %vm36, %v29, 0.0
    %vm38 = vcmask 31744
    %v39 = vsel %vm38, %v37, 0.0
    %40 = vadd.xlane.f32.xlu0 %v39
    %v41 = vpop.xlane.xlu0 %40
    %v42 = vsel %vm38, %v29, -inf
    %43 = vmax.xlane.f32.xlu0 %v42
    %v44 = vpop.xlane.xlu0 %43
    %v45 = vsub.f32 %v29, %v44
    %v46 = vmul.f32 %v45, 1.442695
    %v47 = vpow.pop %v46
    %v48 = vsel %vm38, %v47, 0.0
    %49 = vadd.xlane.f32.xlu0 %v48
    %v50 = vpop.xlane.xlu0 %49
    %v51 = vlog2.pop %v50
    %v52 = vmul.f32 %v51, 0.6931472
    %v53 = vadd.f32 %v44, %v52
    %v54 = vsub.f32 %v53, %v41
    %v55 = vld [vmem:[#allocation2] sm:$0x1]
    %vm56 = vcmask 7168
    %v57 = vsel %vm56, %v54, 0.0
    %58 = vadd.xlane.f32.xlu0 %v57
    %v59 = vpop.xlane.xlu0 %58
    %v60 = vrot.slane %v59, 4
    %v61 = vadd.f32 %v59, %v60
    %v62 = vrot.slane %v61, 2
    %v63 = vadd.f32 %v61, %v62
    %v64 = vrot.slane %v63, 1
    %v65 = vadd.f32 %v63, %v64
    %s66 = vtos %v65
    %v67 = vstv %s66
    %v68 = vadd.f32 %v55, %v67
    %vm69 = vcmask 0
    %70 = vst.msk [vmem:[#allocation2] sm:$0x1] %vm69, %v68
    // Predicated region
    $region18: #{la_loss.1} parent=1 // pred_check
      %p71 = pneg %p15
    $region19: #{la_loss.1} parent=1 // pred_check_branch
      %73 = sbr.rel (%p71) target = $region21
    $region20: #{la_loss.1} parent=1 // pred_region
      %v74 = vld [vmem:[#allocation2] sm:$0x1]
      %v75 = vmul.f32 %v74, 0.125
      %76 = vst.msk [vmem:[#allocation3] sm:$0x1] %vm69, %v75
    $region21: #{la_loss.1} parent=1 // pred_fallthru
      _
    // Predicated region
    $region22: #{la_loss.1} parent=1 // pred_check
      _
    $region23: #{la_loss.1} parent=1 // pred_check_branch
      %78 = sbr.rel (0) target = $region25
    $region24: #{la_loss.1} parent=1 // pred_region
      %s80 = ssub.s32 16, 16
      %81 = vsyncadd [#allocation4], %s80
      %s83 = sshll.u32 [#allocation3], 4
      %s84 = int_to_ptr.vmem [resolvable:$true] %s83
      %86 = dma.vmem_to_hbm [thread:$0]  %s84, 16, %s3, [#allocation4]
    $region25: #{la_loss.1} parent=1 // pred_fallthru
      _
    // Predicated region
    $region26: #{la_loss.1} parent=1 // pred_check
      _
    $region27: #{la_loss.1} parent=1 // pred_check_branch
      %88 = sbr.rel (0) target = $region29
    $region28: #{la_loss.1} parent=1 // pred_region
      %89 = dma.done [#allocation4], 16
    $region29: #{la_loss.1} parent=1 // pred_fallthru
      _
    %90 = vsyncpa [#allocation4], 1

</llo_original>
